<compile_context>
chip_gen: v5e
topology: v5e:2x2
jax: 0.10.0
libtpu: 0.0.40
codegen_flags: <defaults>
</compile_context>

<pallas_src>
import jax
import jax.numpy as jnp
from jax.experimental import pallas as pl
from jax.experimental.pallas import tpu as pltpu  # noqa: F401  (kept for scaling TODOs)

# ---------------- configuration (small, consistent with the module) ---------
VOCAB = 64
DIM = 32          # embedding / model dim
SEQ = 8           # sequence length (== conv in/out channels)
BATCH = 2
NUM_BLOCKS = 2
EXPANSION = 4
HIDDEN = DIM * EXPANSION          # 128 == lane width
BT = BATCH * SEQ                  # 16
LN_EPS = 1e-5
LANES = 128

# ---------------- packed-slab row layout (per layer, lane width 128) --------
R_CONV = 0                        # BT rows,  lanes :BT   block-diag causal conv W
R_W1 = R_CONV + BT                # DIM rows, lanes :H    ln2_g-folded w1
R_W2T = R_W1 + DIM                # DIM rows, lanes :H    transposed w2 (lane-dense)
R_CONVB = R_W2T + DIM             # BT rows,  lanes :DIM  ln1_b-folded conv bias
R_B1 = R_CONVB + BT               # 1 row,    lanes :H    ln2_b-folded MLP bias 1
R_B2 = R_B1 + 1                   # 1 row,    lanes :DIM  MLP bias 2
R_LN1G = R_B2 + 1                 # 1 row,    lanes :DIM  seq-LN gamma
LROWS = ((R_LN1G + 1 + 7) // 8) * 8          # pad to sublane multiple (104)
SLAB_ROWS = VOCAB + NUM_BLOCKS * LROWS       # wte rows 0:VOCAB, then per-layer chunks


def _gelu(x):
    # tanh-approx GELU (robust Mosaic lowering; see TODO above re. exact erf)
    return jax.nn.gelu(x, approximate=True)


# ---------------------------- Pallas kernel ---------------------------------
def mixer_kernel(ids_ref,                 # (BT, 1) int32
                 slab_ref,                # (SLAB_ROWS, 128) f32   all weights
                 o_ref):                  # (BT, DIM) f32
    # --- embedding lookup fused in-kernel as an exact one-hot MXU matmul ----
    ids = ids_ref[...]                                            # (BT, 1) i32
    vocab_iota = jax.lax.broadcasted_iota(jnp.int32, (BT, VOCAB), 1)
    onehot = (vocab_iota == ids).astype(jnp.float32)              # (BT, V)
    wte = slab_ref[0:VOCAB, :DIM]                                 # (V, D)
    x = jnp.dot(onehot, wte, preferred_element_type=jnp.float32)  # (BT, D)

    for l in range(NUM_BLOCKS):                                   # static unroll
        base = VOCAB + l * LROWS
        # ref-level static slices: no whole-tile load, no value-level extracts
        conv_w = slab_ref[base + R_CONV: base + R_CONV + BT, :BT]       # (BT, BT)
        w1 = slab_ref[base + R_W1: base + R_W1 + DIM, :]                # (D, H)
        w2t = slab_ref[base + R_W2T: base + R_W2T + DIM, :]             # (D, H)
        conv_b = slab_ref[base + R_CONVB: base + R_CONVB + BT, :DIM]    # (BT, D)
        b1 = slab_ref[base + R_B1: base + R_B1 + 1, :]                  # (1, H)
        b2 = slab_ref[base + R_B2: base + R_B2 + 1, :DIM]               # (1, D)
        ln1_g = slab_ref[base + R_LN1G: base + R_LN1G + 1, :DIM]        # (1, D)

        # ---- token mixing: seq layernorm -> causal 1x1 conv over seq -------
        mu = jnp.mean(x, axis=-1, keepdims=True)
        var = jnp.mean((x - mu) ** 2, axis=-1, keepdims=True)
        xn = (x - mu) * jax.lax.rsqrt(var + LN_EPS) * ln1_g       # ln1_b folded host-side
        conv = jnp.dot(conv_w, xn, preferred_element_type=jnp.float32) + conv_b
        x = x + conv                                              # residual

        # ---- channel mixing: patch layernorm -> MLP (D -> H -> D) ----------
        mu = jnp.mean(x, axis=-1, keepdims=True)
        var = jnp.mean((x - mu) ** 2, axis=-1, keepdims=True)
        xn = (x - mu) * jax.lax.rsqrt(var + LN_EPS)               # ln2 affine folded into w1/b1
        h = _gelu(jnp.dot(xn, w1, preferred_element_type=jnp.float32) + b1)
        ff = pl.dot(h, w2t, trans_b=True) + b2                    # lane-dense w2
        x = x + ff                                                # residual

    o_ref[...] = x.astype(o_ref.dtype)


def _full_block(shape):
    """Whole-array block, single (grid-less) invocation."""
    nd = len(shape)
    return pl.BlockSpec(shape, lambda *_: (0,) * nd)


# --------------------- one-time parameter packing (host side) ---------------
def pack_params(params):
    """Rearrange PyTorch-layout params into one lane-dense (rows, 128) slab."""
    L = NUM_BLOCKS
    eye_b = jnp.eye(BATCH, dtype=jnp.float32)

    # defensive causal mask, then block-diagonal token-mix weight (L, BT, BT)
    conv_w = jnp.tril(params["conv_w"])
    conv_bd = jax.vmap(lambda w: jnp.kron(eye_b, w))(conv_w)

    # conv bias per output seq position, tiled over batch, broadcast over D
    cb = jnp.tile(params["conv_b"][:, :, 0], (1, BATCH))                # (L, BT)
    conv_b = jnp.broadcast_to(cb[:, :, None], (L, BT, DIM))
    # fold seq-LN beta through the (linear) conv: W @ (1 ⊗ b) = rowsum(W) * b
    conv_b = conv_b + jnp.sum(conv_bd, axis=2)[:, :, None] * params["ln1_b"]

    # fold patch-LN affine into the MLP input projection
    w1 = params["ff_w1"] * jnp.swapaxes(params["ln2_g"], 1, 2)          # (L, D, H)
    b1 = params["ff_b1"] + jnp.einsum("lrd,ldh->lrh",
                                      params["ln2_b"], params["ff_w1"])  # (L, 1, H)

    w2t = jnp.swapaxes(params["ff_w2"], 1, 2)                           # (L, D, H)

    def padlane(a):  # pad last dim to 128 lanes
        pad = [(0, 0)] * (a.ndim - 1) + [(0, LANES - a.shape[-1])]
        return jnp.pad(a, pad)

    layer = jnp.concatenate([
        padlane(conv_bd),                                   # rows R_CONV
        w1,                                                 # rows R_W1   (H == 128)
        w2t,                                                # rows R_W2T
        padlane(conv_b),                                    # rows R_CONVB
        b1,                                                 # row  R_B1
        padlane(params["ff_b2"]),                           # row  R_B2
        padlane(params["ln1_g"]),                           # row  R_LN1G
        jnp.zeros((L, LROWS - (R_LN1G + 1), LANES), jnp.float32),
    ], axis=1)                                              # (L, LROWS, 128)

    slab = jnp.concatenate(
        [padlane(params["wte"]), layer.reshape(L * LROWS, LANES)], axis=0)
    assert slab.shape == (SLAB_ROWS, LANES)
    return slab


# ------------------------------- forward ------------------------------------
@jax.jit
def truncated_model_forward(token_ids, slab):
    """token_ids: (B, T) int32 -> (B, T, D) float32."""
    ids_2d = token_ids.reshape(BT, 1).astype(jnp.int32)

    out_flat = pl.pallas_call(
        mixer_kernel,
        out_shape=jax.ShapeDtypeStruct((BT, DIM), jnp.float32),
        in_specs=[_full_block((BT, 1)), _full_block((SLAB_ROWS, LANES))],
        out_specs=_full_block((BT, DIM)),
    )(ids_2d, slab)

    return out_flat.reshape(BATCH, SEQ, DIM)


# --------------------------- pure-JAX reference ------------------------------
def reference_forward(token_ids, params):
    x = jnp.take(params["wte"], token_ids, axis=0)
    for l in range(NUM_BLOCKS):
        mu = jnp.mean(x, axis=-1, keepdims=True)
        var = jnp.mean((x - mu) ** 2, axis=-1, keepdims=True)
        xn = (x - mu) * jax.lax.rsqrt(var + LN_EPS)
        xn = xn * params["ln1_g"][l] + params["ln1_b"][l]
        conv = jnp.einsum("ts,bsd->btd", jnp.tril(params["conv_w"][l]), xn) + \
            params["conv_b"][l][None]
        x = x + conv

        mu = jnp.mean(x, axis=-1, keepdims=True)
        var = jnp.mean((x - mu) ** 2, axis=-1, keepdims=True)
        xn = (x - mu) * jax.lax.rsqrt(var + LN_EPS)
        xn = xn * params["ln2_g"][l] + params["ln2_b"][l]
        h = _gelu(xn @ params["ff_w1"][l] + params["ff_b1"][l])
        x = x + (h @ params["ff_w2"][l] + params["ff_b2"][l])
    return x


# --------------------------- deterministic params ----------------------------
def init_params(key):
    ks = jax.random.split(key, 11)
    L = NUM_BLOCKS
    conv_w = 0.02 * jax.random.normal(ks[1], (L, SEQ, SEQ), jnp.float32)
    conv_w = jnp.tril(conv_w)   # mixer_mask=True -> causal
    # LN affines deliberately non-trivial so the host-side folding is exercised
    return {
        "wte":    0.02 * jax.random.normal(ks[0], (VOCAB, DIM), jnp.float32),
        "ln1_g":  1.0 + 0.1 * jax.random.normal(ks[5], (L, 1, DIM), jnp.float32),
        "ln1_b":  0.1 * jax.random.normal(ks[6], (L, 1, DIM), jnp.float32),
        "conv_w": conv_w,
        "conv_b": 0.02 * jax.random.normal(ks[2], (L, SEQ, 1), jnp.float32),
        "ln2_g":  1.0 + 0.1 * jax.random.normal(ks[7], (L, 1, DIM), jnp.float32),
        "ln2_b":  0.1 * jax.random.normal(ks[8], (L, 1, DIM), jnp.float32),
        "ff_w1":  0.02 * jax.random.normal(ks[3], (L, DIM, HIDDEN), jnp.float32),
        "ff_b1":  0.02 * jax.random.normal(ks[9], (L, 1, HIDDEN), jnp.float32),
        "ff_w2":  0.02 * jax.random.normal(ks[4], (L, HIDDEN, DIM), jnp.float32),
        "ff_b2":  0.02 * jax.random.normal(ks[10], (L, 1, DIM), jnp.float32),
    }


if __name__ == "__main__":
    key = jax.random.PRNGKey(0)
    pkey, xkey = jax.random.split(key)
    params = init_params(pkey)
    token_ids = jax.random.randint(xkey, (BATCH, SEQ), 0, VOCAB, jnp.int32)

    slab = pack_params(params)                       # one-time weight re-layout
    out = truncated_model_forward(token_ids, slab)
    out = jax.block_until_ready(out)

    ref = reference_forward(token_ids, params)
    assert out.shape == (BATCH, SEQ, DIM)
    max_err = float(jnp.max(jnp.abs(out - ref)))
    assert jnp.allclose(out, ref, atol=1e-4, rtol=1e-4), max_err
    print("KERNEL_OK")
</pallas_src>

<mosaic_0001>
module attributes {stable_mosaic.version = 11 : i64} {
  func.func @mixer_kernel(%arg0: memref<16x1xi32, #tpu.memory_space<vmem>>, %arg1: memref<272x128xf32, #tpu.memory_space<vmem>>, %arg2: memref<16x32xf32, #tpu.memory_space<vmem>>) attributes {dimension_semantics = [], scalar_prefetch = 0 : i64, scratch_operands = 0 : i64, tpu.core_type = #tpu.core_type<tc>} {
    %c0 = arith.constant 0 : index
    %c0_0 = arith.constant 0 : index
    %0 = vector.load %arg0[%c0, %c0_0] : memref<16x1xi32, #tpu.memory_space<vmem>>, vector<16x1xi32>
    %1 = tpu.iota {dimensions = array<i32: 1>} : vector<16x64xi32>
    %2 = vector.broadcast %0 : vector<16x1xi32> to vector<16x64xi32>
    %3 = arith.cmpi eq, %1, %2 : vector<16x64xi32>
    %4 = arith.extui %3 : vector<16x64xi1> to vector<16x64xi32>
    %5 = arith.sitofp %4 : vector<16x64xi32> to vector<16x64xf32>
    %c0_1 = arith.constant 0 : index
    %c0_2 = arith.constant 0 : index
    %6 = vector.load %arg1[%c0_1, %c0_2] : memref<272x128xf32, #tpu.memory_space<vmem>>, vector<64x32xf32>
    %cst = arith.constant dense<0.000000e+00> : vector<16x32xf32>
    %7 = tpu.matmul %5, %6, %cst {dimension_numbers = #tpu.dot_dimension_numbers<[1], [0], [0], [1], [0, 0, 1, 1], [], []>} : vector<16x64xf32>, vector<64x32xf32>, vector<16x32xf32> -> vector<16x32xf32>
    %c64 = arith.constant 64 : index
    %c0_3 = arith.constant 0 : index
    %8 = vector.load %arg1[%c64, %c0_3] : memref<272x128xf32, #tpu.memory_space<vmem>>, vector<16x16xf32>
    %c80 = arith.constant 80 : index
    %c0_4 = arith.constant 0 : index
    %9 = vector.load %arg1[%c80, %c0_4] : memref<272x128xf32, #tpu.memory_space<vmem>>, vector<32x128xf32>
    %c112 = arith.constant 112 : index
    %c0_5 = arith.constant 0 : index
    %10 = vector.load %arg1[%c112, %c0_5] : memref<272x128xf32, #tpu.memory_space<vmem>>, vector<32x128xf32>
    %c144 = arith.constant 144 : index
    %c0_6 = arith.constant 0 : index
    %11 = vector.load %arg1[%c144, %c0_6] : memref<272x128xf32, #tpu.memory_space<vmem>>, vector<16x32xf32>
    %c160 = arith.constant 160 : index
    %c0_7 = arith.constant 0 : index
    %12 = vector.load %arg1[%c160, %c0_7] : memref<272x128xf32, #tpu.memory_space<vmem>>, vector<1x128xf32>
    %c161 = arith.constant 161 : index
    %c0_8 = arith.constant 0 : index
    %13 = vector.load %arg1[%c161, %c0_8] : memref<272x128xf32, #tpu.memory_space<vmem>>, vector<1x32xf32>
    %c162 = arith.constant 162 : index
    %c0_9 = arith.constant 0 : index
    %14 = vector.load %arg1[%c162, %c0_9] : memref<272x128xf32, #tpu.memory_space<vmem>>, vector<1x32xf32>
    %cst_10 = arith.constant dense<0.000000e+00> : vector<16xf32>
    %15 = vector.multi_reduction <add>, %7, %cst_10 [1] : vector<16x32xf32> to vector<16xf32>
    %16 = vector.shape_cast %15 : vector<16xf32> to vector<16x1xf32>
    %cst_11 = arith.constant 3.200000e+01 : f32
    %17 = vector.broadcast %cst_11 : f32 to vector<16x1xf32>
    %18 = arith.divf %16, %17 : vector<16x1xf32>
    %19 = vector.broadcast %18 : vector<16x1xf32> to vector<16x32xf32>
    %20 = arith.subf %7, %19 : vector<16x32xf32>
    %21 = arith.mulf %20, %20 : vector<16x32xf32>
    %cst_12 = arith.constant dense<0.000000e+00> : vector<16xf32>
    %22 = vector.multi_reduction <add>, %21, %cst_12 [1] : vector<16x32xf32> to vector<16xf32>
    %23 = vector.shape_cast %22 : vector<16xf32> to vector<16x1xf32>
    %cst_13 = arith.constant 3.200000e+01 : f32
    %24 = vector.broadcast %cst_13 : f32 to vector<16x1xf32>
    %25 = arith.divf %23, %24 : vector<16x1xf32>
    %26 = vector.broadcast %18 : vector<16x1xf32> to vector<16x32xf32>
    %27 = arith.subf %7, %26 : vector<16x32xf32>
    %cst_14 = arith.constant 9.99999974E-6 : f32
    %28 = vector.broadcast %cst_14 : f32 to vector<16x1xf32>
    %29 = arith.addf %25, %28 : vector<16x1xf32>
    %30 = math.rsqrt %29 : vector<16x1xf32>
    %31 = vector.broadcast %30 : vector<16x1xf32> to vector<16x32xf32>
    %32 = arith.mulf %27, %31 : vector<16x32xf32>
    %33 = vector.broadcast %14 : vector<1x32xf32> to vector<16x32xf32>
    %34 = arith.mulf %32, %33 : vector<16x32xf32>
    %cst_15 = arith.constant dense<0.000000e+00> : vector<16x32xf32>
    %35 = tpu.matmul %8, %34, %cst_15 {dimension_numbers = #tpu.dot_dimension_numbers<[1], [0], [0], [1], [0, 0, 1, 1], [], []>} : vector<16x16xf32>, vector<16x32xf32>, vector<16x32xf32> -> vector<16x32xf32>
    %36 = arith.addf %35, %11 : vector<16x32xf32>
    %37 = arith.addf %7, %36 : vector<16x32xf32>
    %cst_16 = arith.constant dense<0.000000e+00> : vector<16xf32>
    %38 = vector.multi_reduction <add>, %37, %cst_16 [1] : vector<16x32xf32> to vector<16xf32>
    %39 = vector.shape_cast %38 : vector<16xf32> to vector<16x1xf32>
    %cst_17 = arith.constant 3.200000e+01 : f32
    %40 = vector.broadcast %cst_17 : f32 to vector<16x1xf32>
    %41 = arith.divf %39, %40 : vector<16x1xf32>
    %42 = vector.broadcast %41 : vector<16x1xf32> to vector<16x32xf32>
    %43 = arith.subf %37, %42 : vector<16x32xf32>
    %44 = arith.mulf %43, %43 : vector<16x32xf32>
    %cst_18 = arith.constant dense<0.000000e+00> : vector<16xf32>
    %45 = vector.multi_reduction <add>, %44, %cst_18 [1] : vector<16x32xf32> to vector<16xf32>
    %46 = vector.shape_cast %45 : vector<16xf32> to vector<16x1xf32>
    %cst_19 = arith.constant 3.200000e+01 : f32
    %47 = vector.broadcast %cst_19 : f32 to vector<16x1xf32>
    %48 = arith.divf %46, %47 : vector<16x1xf32>
    %49 = vector.broadcast %41 : vector<16x1xf32> to vector<16x32xf32>
    %50 = arith.subf %37, %49 : vector<16x32xf32>
    %cst_20 = arith.constant 9.99999974E-6 : f32
    %51 = vector.broadcast %cst_20 : f32 to vector<16x1xf32>
    %52 = arith.addf %48, %51 : vector<16x1xf32>
    %53 = math.rsqrt %52 : vector<16x1xf32>
    %54 = vector.broadcast %53 : vector<16x1xf32> to vector<16x32xf32>
    %55 = arith.mulf %50, %54 : vector<16x32xf32>
    %cst_21 = arith.constant dense<0.000000e+00> : vector<16x128xf32>
    %56 = tpu.matmul %55, %9, %cst_21 {dimension_numbers = #tpu.dot_dimension_numbers<[1], [0], [0], [1], [0, 0, 1, 1], [], []>} : vector<16x32xf32>, vector<32x128xf32>, vector<16x128xf32> -> vector<16x128xf32>
    %57 = vector.broadcast %12 : vector<1x128xf32> to vector<16x128xf32>
    %58 = arith.addf %56, %57 : vector<16x128xf32>
    %59 = arith.mulf %58, %58 : vector<16x128xf32>
    %60 = arith.mulf %58, %59 : vector<16x128xf32>
    %cst_22 = arith.constant 4.471500e-02 : f32
    %61 = vector.broadcast %cst_22 : f32 to vector<16x128xf32>
    %62 = arith.mulf %61, %60 : vector<16x128xf32>
    %63 = arith.addf %58, %62 : vector<16x128xf32>
    %cst_23 = arith.constant 0.797884583 : f32
    %64 = vector.broadcast %cst_23 : f32 to vector<16x128xf32>
    %65 = arith.mulf %64, %63 : vector<16x128xf32>
    %66 = math.tanh %65 : vector<16x128xf32>
    %cst_24 = arith.constant 1.000000e+00 : f32
    %67 = vector.broadcast %cst_24 : f32 to vector<16x128xf32>
    %68 = arith.addf %67, %66 : vector<16x128xf32>
    %cst_25 = arith.constant 5.000000e-01 : f32
    %69 = vector.broadcast %cst_25 : f32 to vector<16x128xf32>
    %70 = arith.mulf %69, %68 : vector<16x128xf32>
    %71 = arith.mulf %58, %70 : vector<16x128xf32>
    %cst_26 = arith.constant dense<0.000000e+00> : vector<16x32xf32>
    %72 = tpu.matmul %71, %10, %cst_26 {dimension_numbers = #tpu.dot_dimension_numbers<[1], [1], [0], [0], [0, 0, 1, 0], [], []>} : vector<16x128xf32>, vector<32x128xf32>, vector<16x32xf32> -> vector<16x32xf32>
    %73 = vector.broadcast %13 : vector<1x32xf32> to vector<16x32xf32>
    %74 = arith.addf %72, %73 : vector<16x32xf32>
    %75 = arith.addf %37, %74 : vector<16x32xf32>
    %c168 = arith.constant 168 : index
    %c0_27 = arith.constant 0 : index
    %76 = vector.load %arg1[%c168, %c0_27] : memref<272x128xf32, #tpu.memory_space<vmem>>, vector<16x16xf32>
    %c184 = arith.constant 184 : index
    %c0_28 = arith.constant 0 : index
    %77 = vector.load %arg1[%c184, %c0_28] : memref<272x128xf32, #tpu.memory_space<vmem>>, vector<32x128xf32>
    %c216 = arith.constant 216 : index
    %c0_29 = arith.constant 0 : index
    %78 = vector.load %arg1[%c216, %c0_29] : memref<272x128xf32, #tpu.memory_space<vmem>>, vector<32x128xf32>
    %c248 = arith.constant 248 : index
    %c0_30 = arith.constant 0 : index
    %79 = vector.load %arg1[%c248, %c0_30] : memref<272x128xf32, #tpu.memory_space<vmem>>, vector<16x32xf32>
    %c264 = arith.constant 264 : index
    %c0_31 = arith.constant 0 : index
    %80 = vector.load %arg1[%c264, %c0_31] : memref<272x128xf32, #tpu.memory_space<vmem>>, vector<1x128xf32>
    %c265 = arith.constant 265 : index
    %c0_32 = arith.constant 0 : index
    %81 = vector.load %arg1[%c265, %c0_32] : memref<272x128xf32, #tpu.memory_space<vmem>>, vector<1x32xf32>
    %c266 = arith.constant 266 : index
    %c0_33 = arith.constant 0 : index
    %82 = vector.load %arg1[%c266, %c0_33] : memref<272x128xf32, #tpu.memory_space<vmem>>, vector<1x32xf32>
    %cst_34 = arith.constant dense<0.000000e+00> : vector<16xf32>
    %83 = vector.multi_reduction <add>, %75, %cst_34 [1] : vector<16x32xf32> to vector<16xf32>
    %84 = vector.shape_cast %83 : vector<16xf32> to vector<16x1xf32>
    %cst_35 = arith.constant 3.200000e+01 : f32
    %85 = vector.broadcast %cst_35 : f32 to vector<16x1xf32>
    %86 = arith.divf %84, %85 : vector<16x1xf32>
    %87 = vector.broadcast %86 : vector<16x1xf32> to vector<16x32xf32>
    %88 = arith.subf %75, %87 : vector<16x32xf32>
    %89 = arith.mulf %88, %88 : vector<16x32xf32>
    %cst_36 = arith.constant dense<0.000000e+00> : vector<16xf32>
    %90 = vector.multi_reduction <add>, %89, %cst_36 [1] : vector<16x32xf32> to vector<16xf32>
    %91 = vector.shape_cast %90 : vector<16xf32> to vector<16x1xf32>
    %cst_37 = arith.constant 3.200000e+01 : f32
    %92 = vector.broadcast %cst_37 : f32 to vector<16x1xf32>
    %93 = arith.divf %91, %92 : vector<16x1xf32>
    %94 = vector.broadcast %86 : vector<16x1xf32> to vector<16x32xf32>
    %95 = arith.subf %75, %94 : vector<16x32xf32>
    %cst_38 = arith.constant 9.99999974E-6 : f32
    %96 = vector.broadcast %cst_38 : f32 to vector<16x1xf32>
    %97 = arith.addf %93, %96 : vector<16x1xf32>
    %98 = math.rsqrt %97 : vector<16x1xf32>
    %99 = vector.broadcast %98 : vector<16x1xf32> to vector<16x32xf32>
    %100 = arith.mulf %95, %99 : vector<16x32xf32>
    %101 = vector.broadcast %82 : vector<1x32xf32> to vector<16x32xf32>
    %102 = arith.mulf %100, %101 : vector<16x32xf32>
    %cst_39 = arith.constant dense<0.000000e+00> : vector<16x32xf32>
    %103 = tpu.matmul %76, %102, %cst_39 {dimension_numbers = #tpu.dot_dimension_numbers<[1], [0], [0], [1], [0, 0, 1, 1], [], []>} : vector<16x16xf32>, vector<16x32xf32>, vector<16x32xf32> -> vector<16x32xf32>
    %104 = arith.addf %103, %79 : vector<16x32xf32>
    %105 = arith.addf %75, %104 : vector<16x32xf32>
    %cst_40 = arith.constant dense<0.000000e+00> : vector<16xf32>
    %106 = vector.multi_reduction <add>, %105, %cst_40 [1] : vector<16x32xf32> to vector<16xf32>
    %107 = vector.shape_cast %106 : vector<16xf32> to vector<16x1xf32>
    %cst_41 = arith.constant 3.200000e+01 : f32
    %108 = vector.broadcast %cst_41 : f32 to vector<16x1xf32>
    %109 = arith.divf %107, %108 : vector<16x1xf32>
    %110 = vector.broadcast %109 : vector<16x1xf32> to vector<16x32xf32>
    %111 = arith.subf %105, %110 : vector<16x32xf32>
    %112 = arith.mulf %111, %111 : vector<16x32xf32>
    %cst_42 = arith.constant dense<0.000000e+00> : vector<16xf32>
    %113 = vector.multi_reduction <add>, %112, %cst_42 [1] : vector<16x32xf32> to vector<16xf32>
    %114 = vector.shape_cast %113 : vector<16xf32> to vector<16x1xf32>
    %cst_43 = arith.constant 3.200000e+01 : f32
    %115 = vector.broadcast %cst_43 : f32 to vector<16x1xf32>
    %116 = arith.divf %114, %115 : vector<16x1xf32>
    %117 = vector.broadcast %109 : vector<16x1xf32> to vector<16x32xf32>
    %118 = arith.subf %105, %117 : vector<16x32xf32>
    %cst_44 = arith.constant 9.99999974E-6 : f32
    %119 = vector.broadcast %cst_44 : f32 to vector<16x1xf32>
    %120 = arith.addf %116, %119 : vector<16x1xf32>
    %121 = math.rsqrt %120 : vector<16x1xf32>
    %122 = vector.broadcast %121 : vector<16x1xf32> to vector<16x32xf32>
    %123 = arith.mulf %118, %122 : vector<16x32xf32>
    %cst_45 = arith.constant dense<0.000000e+00> : vector<16x128xf32>
    %124 = tpu.matmul %123, %77, %cst_45 {dimension_numbers = #tpu.dot_dimension_numbers<[1], [0], [0], [1], [0, 0, 1, 1], [], []>} : vector<16x32xf32>, vector<32x128xf32>, vector<16x128xf32> -> vector<16x128xf32>
    %125 = vector.broadcast %80 : vector<1x128xf32> to vector<16x128xf32>
    %126 = arith.addf %124, %125 : vector<16x128xf32>
    %127 = arith.mulf %126, %126 : vector<16x128xf32>
    %128 = arith.mulf %126, %127 : vector<16x128xf32>
    %cst_46 = arith.constant 4.471500e-02 : f32
    %129 = vector.broadcast %cst_46 : f32 to vector<16x128xf32>
    %130 = arith.mulf %129, %128 : vector<16x128xf32>
    %131 = arith.addf %126, %130 : vector<16x128xf32>
    %cst_47 = arith.constant 0.797884583 : f32
    %132 = vector.broadcast %cst_47 : f32 to vector<16x128xf32>
    %133 = arith.mulf %132, %131 : vector<16x128xf32>
    %134 = math.tanh %133 : vector<16x128xf32>
    %cst_48 = arith.constant 1.000000e+00 : f32
    %135 = vector.broadcast %cst_48 : f32 to vector<16x128xf32>
    %136 = arith.addf %135, %134 : vector<16x128xf32>
    %cst_49 = arith.constant 5.000000e-01 : f32
    %137 = vector.broadcast %cst_49 : f32 to vector<16x128xf32>
    %138 = arith.mulf %137, %136 : vector<16x128xf32>
    %139 = arith.mulf %126, %138 : vector<16x128xf32>
    %cst_50 = arith.constant dense<0.000000e+00> : vector<16x32xf32>
    %140 = tpu.matmul %139, %78, %cst_50 {dimension_numbers = #tpu.dot_dimension_numbers<[1], [1], [0], [0], [0, 0, 1, 0], [], []>} : vector<16x128xf32>, vector<32x128xf32>, vector<16x32xf32> -> vector<16x32xf32>
    %141 = vector.broadcast %81 : vector<1x32xf32> to vector<16x32xf32>
    %142 = arith.addf %140, %141 : vector<16x32xf32>
    %143 = arith.addf %105, %142 : vector<16x32xf32>
    %c0_51 = arith.constant 0 : index
    %c0_52 = arith.constant 0 : index
    %144 = vector.load %arg2[%c0_51, %c0_52] : memref<16x32xf32, #tpu.memory_space<vmem>>, vector<16x32xf32>
    tpu.vector_store %arg2[%c0_51, %c0_52], %143 {strides = array<i32>} : memref<16x32xf32, #tpu.memory_space<vmem>>, vector<16x32xf32>,
    return
  }
}

</mosaic_0001>

<llo_original>
// kernel: truncated_model_forward.1
$region0: #{truncated_model_forward.1}
  #allocation0 [shape = 'u32[]', space=smem, size = 0x4, offset = 0x4, fixed_abs, tag = 'smem constant byte address 0x4 - core index']
  #allocation1 [shape = 'u32[72,128]{1,0:T(1,128)}', space=vmem, size = 0x9000, scoped, tag = 'internal scratch']
  %s0 = inlined_call_operand.vmem [shape: s32[16,1], index: 0, kind: input, shape index: {}]
  %s1 = inlined_call_operand.hbm [shape: f32[272,128], index: 1, kind: input, shape index: {}]
  %s2 = inlined_call_operand.hbm [shape: f32[16,32], index: 2, kind: output, shape index: {}]
  %s3 = sld [smem:[#allocation0]]
  $region22: #{truncated_model_forward.1} parent=0
    _
  %s5 = ssub.s32 1, %s3
  %s6 = scalar_select 0, %s5, %s3
  $region1: #{truncated_model_forward.1} parent=0
    #allocation2 [shape = 'u8[139264]{0}', space=vmem, size = 0x22000, scoped, tag = 'input window, operand 1, single buffered']
    #allocation3 [shape = 's32[1]{0}', space=sflag, size = 0x4, scoped, tag = 'scoped memory for truncated_model_forward.1']
    #allocation4 [shape = 's32[1]{0}', space=sflag, size = 0x4, scoped, tag = 'scoped memory for truncated_model_forward.1']
    #allocation5 [shape = 'u8[8192]{0}', space=vmem, size = 0x2000, scoped, tag = 'output window, operand 0, single buffered']
    %7 = vsyncpa [#allocation3], 0
    %8 = vsyncpa [#allocation4], 0
    // Predicated region
    $region2: #{truncated_model_forward.1} parent=1 // pred_check
      _
    $region3: #{truncated_model_forward.1} parent=1 // pred_check_branch
      %10 = sbr.rel (0) target = $region5
    $region4: #{truncated_model_forward.1} parent=1 // pred_region
      _
    $region5: #{truncated_model_forward.1} parent=1 // pred_fallthru
      _
    // Predicated region
    $region6: #{truncated_model_forward.1} parent=1 // pred_check
      _
    $region7: #{truncated_model_forward.1} parent=1 // pred_check_branch
      %12 = sbr.rel (0) target = $region9
    $region8: #{truncated_model_forward.1} parent=1 // pred_region
      %14 = vsyncadd [#allocation3], 0
      %s15 = sshll.u32 %s1, 4
      %s16 = int_to_ptr.hbm [resolvable:$true] %s15
      %s17 = sshll.u32 [#allocation2], 4
      %s18 = int_to_ptr.vmem [resolvable:$true] %s17
      %23 = dma.hbm_to_vmem [thread:$0]  %s16, 4352, %s18, [#allocation3], 128, 128, 8
    $region9: #{truncated_model_forward.1} parent=1 // pred_fallthru
      _
    // Predicated region
    $region10: #{truncated_model_forward.1} parent=1 // pred_check
      _
    $region11: #{truncated_model_forward.1} parent=1 // pred_check_branch
      %25 = sbr.rel (0) target = $region13
    $region12: #{truncated_model_forward.1} parent=1 // pred_region
      %27 = dma.done [#allocation3], 4352
    $region13: #{truncated_model_forward.1} parent=1 // pred_fallthru
      _
    %v28 = vld [vmem:[%s0] sm:$0xff]
    %v29 = vld [vmem:[%s0 + $0x8] sm:$0xff]
    %v30 = vlaneseq
    %v31 = vand.u32 %v30, 127
    %32 = vset.pattern.permute.xlu0 0
    %33 = vperm.xlu0 %32, %v28
    %v34 = vpop.permute.xlu0 %33
    %35 = vset.pattern.permute.xlu0 0
    %36 = vperm.xlu0 %35, %v29
    %v37 = vpop.permute.xlu0 %36
    %vm38 = vcmp.eq.s32.totalorder %v31, %v34
    %vm39 = vcmp.eq.s32.totalorder %v31, %v37
    %v40 = vsel %vm38, 1, 0
    %v41 = vsel %vm39, 1, 0
    %v42 = vcvt.s32.f32 %v40
    %v43 = vcvt.s32.f32 %v41
    %v44 = vld [vmem:[#allocation2] sm:$0xff]
    %v45 = vld [vmem:[#allocation2 + $0x8] sm:$0xff]
    %v46 = vld [vmem:[#allocation2 + $0x10] sm:$0xff]
    %v47 = vld [vmem:[#allocation2 + $0x18] sm:$0xff]
    %v48 = vld [vmem:[#allocation2 + $0x20] sm:$0xff]
    %v49 = vld [vmem:[#allocation2 + $0x28] sm:$0xff]
    %v50 = vld [vmem:[#allocation2 + $0x30] sm:$0xff]
    %v51 = vld [vmem:[#allocation2 + $0x38] sm:$0xff]
    %vm52 = vcmask 523264
    %v54 = vsel %vm52, %v42, 0
    %v57 = vsel %vm52, %v43, 0
    %59 = vmatpush.msra.mxu0 0.0
    %60 = vmatpush.msra.mxu0 0.0
    %61 = vmatpush.msra.mxu0 0.0
    %62 = vmatpush.msra.mxu0 0.0
    %63 = vmatpush.msra.mxu0 0.0
    %64 = vmatpush.msra.mxu0 0.0
    %65 = vmatpush.msra.mxu0 0.0
    %66 = vmatpush.msra.mxu0 0.0
    %67 = vmatpush.msra.mxu0 %v51
    %68 = vmatpush.msra.mxu0 %v50
    %69 = vmatpush.msra.mxu0 %v49
    %70 = vmatpush.msra.mxu0 %v48
    %71 = vmatpush.msra.mxu0 %v47
    %72 = vmatpush.msra.mxu0 %v46
    %73 = vmatpush.msra.mxu0 %v45
    %74 = vmatpush.msra.mxu0 %v44
    %75 = vmatmul.f32.gmra.mxu0 %v54
    %v76 = vpop.f32.mrf.mxu0
    %v77 = vadd.f32 0.0, %v76
    %78 = vmatmul.f32.gmra.mxu0 %v57
    %v79 = vpop.f32.mrf.mxu0
    %v80 = vadd.f32 0.0, %v79
    %81 = vdwg.mxu0
    %v82 = vld [vmem:[#allocation2 + $0x40] sm:$0xff]
    %v83 = vld [vmem:[#allocation2 + $0x48] sm:$0xff]
    %v84 = vld [vmem:[#allocation2 + $0x50] sm:$0xff]
    %v85 = vld [vmem:[#allocation2 + $0x58] sm:$0xff]
    %v86 = vld [vmem:[#allocation2 + $0x60] sm:$0xff]
    %v87 = vld [vmem:[#allocation2 + $0x68] sm:$0xff]
    %v88 = vld [vmem:[#allocation2 + $0x70] sm:$0xff]
    %v89 = vld [vmem:[#allocation2 + $0x78] sm:$0xff]
    %v90 = vld [vmem:[#allocation2 + $0x80] sm:$0xff]
    %v91 = vld [vmem:[#allocation2 + $0x88] sm:$0xff]
    %v92 = vld [vmem:[#allocation2 + $0x90] sm:$0xff]
    %v93 = vld [vmem:[#allocation2 + $0x98] sm:$0xff]
    %v94 = vld [vmem:[#allocation2 + $0xa0] sm:$0x1]
    %v95 = vld [vmem:[#allocation2 + $0xa1] sm:$0x1]
    %v96 = vld [vmem:[#allocation2 + $0xa2] sm:$0x1]
    %vm97 = vcmask 261120
    %v98 = vsel %vm97, %v77, 0.0
    %99 = vadd.xlane.f32.xlu0 %v98
    %v100 = vpop.xlane.xlu0 %99
    %v101 = vsel %vm97, %v80, 0.0
    %102 = vadd.xlane.f32.xlu0 %v101
    %v103 = vpop.xlane.xlu0 %102
    %v104 = vrcp.pop 32.0
    %v105 = vmul.f32 32.0, %v104
    %v106 = vsub.f32 1.0, %v105
    %v107 = vmul.f32 %v104, %v106
    %v108 = vadd.f32 %v104, %v107
    %vm109 = vweird.f32 %v104
    %v110 = vsel %vm109, %v104, %v108
    %v111 = vmul.f32 %v100, %v110
    %v112 = vmul.f32 %v103, %v110
    %v113 = vsub.f32 %v77, %v111
    %v114 = vsub.f32 %v80, %v112
    %v115 = vmul.f32 %v113, %v113
    %v116 = vmul.f32 %v114, %v114
    %v117 = vsel %vm97, %v115, 0.0
    %118 = vadd.xlane.f32.xlu0 %v117
    %v119 = vpop.xlane.xlu0 %118
    %v120 = vsel %vm97, %v116, 0.0
    %121 = vadd.xlane.f32.xlu0 %v120
    %v122 = vpop.xlane.xlu0 %121
    %v123 = vmul.f32 %v119, %v110
    %v124 = vmul.f32 %v122, %v110
    %v125 = vadd.f32 %v123, 1e-05
    %v126 = vadd.f32 %v124, 1e-05
    %v127 = vrsqrt.pop %v125
    %v128 = vmul.f32 %v127, %v125
    %v129 = vmul.f32 %v128, %v127
    %v130 = vmul.f32 0.5, %v129
    %v131 = vsub.f32 1.5, %v130
    %v132 = vmul.f32 %v127, %v131
    %vm133 = vweird.f32 %v125
    %vm134 = vweird.f32 %v127
    %vm135 = vmor %vm133, %vm134
    %v136 = vsel %vm135, %v127, %v132
    %v137 = vrsqrt.pop %v126
    %v138 = vmul.f32 %v137, %v126
    %v139 = vmul.f32 %v138, %v137
    %v140 = vmul.f32 0.5, %v139
    %v141 = vsub.f32 1.5, %v140
    %v142 = vmul.f32 %v137, %v141
    %vm143 = vweird.f32 %v126
    %vm144 = vweird.f32 %v137
    %vm145 = vmor %vm143, %vm144
    %v146 = vsel %vm145, %v137, %v142
    %v147 = vmul.f32 %v113, %v136
    %v148 = vmul.f32 %v114, %v146
    %v149 = vperm.slane %v96, 0
    %v150 = vmul.f32 %v147, %v149
    %v151 = vmul.f32 %v148, %v149
    %vm152 = vcmask 130048
    %v154 = vsel %vm152, %v82, 0
    %v157 = vsel %vm152, %v83, 0
    %159 = vmatpush.msra.mxu0 0.0
    %160 = vmatpush.msra.mxu0 0.0
    %161 = vmatpush.msra.mxu0 0.0
    %162 = vmatpush.msra.mxu0 0.0
    %163 = vmatpush.msra.mxu0 0.0
    %164 = vmatpush.msra.mxu0 0.0
    %165 = vmatpush.msra.mxu0 0.0
    %166 = vmatpush.msra.mxu0 0.0
    %167 = vmatpush.msra.mxu0 0.0
    %168 = vmatpush.msra.mxu0 0.0
    %169 = vmatpush.msra.mxu0 0.0
    %170 = vmatpush.msra.mxu0 0.0
    %171 = vmatpush.msra.mxu0 0.0
    %172 = vmatpush.msra.mxu0 0.0
    %173 = vmatpush.msra.mxu0 %v151
    %174 = vmatpush.msra.mxu0 %v150
    %175 = vmatmul.f32.gmra.mxu0 %v154
    %v176 = vpop.f32.mrf.mxu0
    %v177 = vadd.f32 %v92, %v176
    %178 = vmatmul.f32.gmra.mxu0 %v157
    %v179 = vpop.f32.mrf.mxu0
    %v180 = vadd.f32 %v93, %v179
    %181 = vdwg.mxu0
    %v182 = vadd.f32 %v77, %v177
    %v183 = vadd.f32 %v80, %v180
    %v184 = vsel %vm97, %v182, 0.0
    %185 = vadd.xlane.f32.xlu0 %v184
    %v186 = vpop.xlane.xlu0 %185
    %v187 = vsel %vm97, %v183, 0.0
    %188 = vadd.xlane.f32.xlu0 %v187
    %v189 = vpop.xlane.xlu0 %188
    %v190 = vmul.f32 %v186, %v110
    %v191 = vmul.f32 %v189, %v110
    %v192 = vsub.f32 %v182, %v190
    %v193 = vsub.f32 %v183, %v191
    %v194 = vmul.f32 %v192, %v192
    %v195 = vmul.f32 %v193, %v193
    %v196 = vsel %vm97, %v194, 0.0
    %197 = vadd.xlane.f32.xlu0 %v196
    %v198 = vpop.xlane.xlu0 %197
    %v199 = vsel %vm97, %v195, 0.0
    %200 = vadd.xlane.f32.xlu0 %v199
    %v201 = vpop.xlane.xlu0 %200
    %v202 = vmul.f32 %v198, %v110
    %v203 = vmul.f32 %v201, %v110
    %v204 = vadd.f32 %v202, 1e-05
    %v205 = vadd.f32 %v203, 1e-05
    %v206 = vrsqrt.pop %v204
    %v207 = vmul.f32 %v206, %v204
    %v208 = vmul.f32 %v207, %v206
    %v209 = vmul.f32 0.5, %v208
    %v210 = vsub.f32 1.5, %v209
    %v211 = vmul.f32 %v206, %v210
    %vm212 = vweird.f32 %v204
    %vm213 = vweird.f32 %v206
    %vm214 = vmor %vm212, %vm213
    %v215 = vsel %vm214, %v206, %v211
    %v216 = vrsqrt.pop %v205
    %v217 = vmul.f32 %v216, %v205
    %v218 = vmul.f32 %v217, %v216
    %v219 = vmul.f32 0.5, %v218
    %v220 = vsub.f32 1.5, %v219
    %v221 = vmul.f32 %v216, %v220
    %vm222 = vweird.f32 %v205
    %vm223 = vweird.f32 %v216
    %vm224 = vmor %vm222, %vm223
    %v225 = vsel %vm224, %v216, %v221
    %v226 = vmul.f32 %v192, %v215
    %v227 = vmul.f32 %v193, %v225
    %v228 = vperm.slane %v94, 0
    %v230 = vsel %vm97, %v226, 0
    %v233 = vsel %vm97, %v227, 0
    %235 = vmatpush.msra.mxu0 0.0
    %236 = vmatpush.msra.mxu0 0.0
    %237 = vmatpush.msra.mxu0 0.0
    %238 = vmatpush.msra.mxu0 0.0
    %239 = vmatpush.msra.mxu0 0.0
    %240 = vmatpush.msra.mxu0 0.0
    %241 = vmatpush.msra.mxu0 0.0
    %242 = vmatpush.msra.mxu0 0.0
    %243 = vmatpush.msra.mxu0 0.0
    %244 = vmatpush.msra.mxu0 0.0
    %245 = vmatpush.msra.mxu0 0.0
    %246 = vmatpush.msra.mxu0 0.0
    %247 = vmatpush.msra.mxu0 %v87
    %248 = vmatpush.msra.mxu0 %v86
    %249 = vmatpush.msra.mxu0 %v85
    %250 = vmatpush.msra.mxu0 %v84
    %251 = vmatmul.f32.gmra.mxu0 %v230
    %v252 = vpop.f32.mrf.mxu0
    %v253 = vadd.f32 %v228, %v252
    %254 = vmatmul.f32.gmra.mxu0 %v233
    %v255 = vpop.f32.mrf.mxu0
    %v256 = vadd.f32 %v228, %v255
    %257 = vdwg.mxu0
    %v258 = vmul.f32 %v253, %v253
    %v259 = vmul.f32 %v256, %v256
    %v260 = vmul.f32 %v253, %v258
    %v261 = vmul.f32 %v256, %v259
    %v262 = vmul.f32 %v260, 0.044715
    %v263 = vmul.f32 %v261, 0.044715
    %v264 = vadd.f32 %v253, %v262
    %v265 = vadd.f32 %v256, %v263
    %v266 = vmul.f32 %v264, 0.7978846
    %v267 = vmul.f32 %v265, 0.7978846
    %v268 = vtanh.pop %v266
    %v269 = vtanh.pop %v267
    %v270 = vadd.f32 %v268, 1.0
    %v271 = vadd.f32 %v269, 1.0
    %v272 = vmul.f32 %v270, 0.5
    %v273 = vmul.f32 %v271, 0.5
    %v274 = vmul.f32 %v253, %v272
    %v275 = vmul.f32 %v256, %v273
    %v276 = vperm.slane %v95, 0
    %277 = vmatpush.xpose.msra.mxu0 0.0
    %278 = vmatpush.xpose.msra.mxu0 0.0
    %279 = vmatpush.xpose.msra.mxu0 0.0
    %280 = vmatpush.xpose.msra.mxu0 0.0
    %281 = vmatpush.xpose.msra.mxu0 0.0
    %282 = vmatpush.xpose.msra.mxu0 0.0
    %283 = vmatpush.xpose.msra.mxu0 0.0
    %284 = vmatpush.xpose.msra.mxu0 0.0
    %285 = vmatpush.xpose.msra.mxu0 0.0
    %286 = vmatpush.xpose.msra.mxu0 0.0
    %287 = vmatpush.xpose.msra.mxu0 0.0
    %288 = vmatpush.xpose.msra.mxu0 0.0
    %289 = vmatpush.xpose.msra.mxu0 %v91
    %290 = vmatpush.xpose.msra.mxu0 %v90
    %291 = vmatpush.xpose.msra.mxu0 %v89
    %292 = vmatpush.xpose.msra.mxu0 %v88
    %293 = vmatmul.f32.gmra.mxu0 %v274
    %v294 = vpop.f32.mrf.mxu0
    %v295 = vadd.f32 %v276, %v294
    %296 = vmatmul.f32.gmra.mxu0 %v275
    %v297 = vpop.f32.mrf.mxu0
    %v298 = vadd.f32 %v276, %v297
    %299 = vdwg.mxu0
    %v300 = vadd.f32 %v182, %v295
    %v301 = vadd.f32 %v183, %v298
    %v302 = vld [vmem:[#allocation2 + $0xa8] sm:$0xff]
    %v303 = vld [vmem:[#allocation2 + $0xb0] sm:$0xff]
    %v304 = vld [vmem:[#allocation2 + $0xb8] sm:$0xff]
    %v305 = vld [vmem:[#allocation2 + $0xc0] sm:$0xff]
    %v306 = vld [vmem:[#allocation2 + $0xc8] sm:$0xff]
    %v307 = vld [vmem:[#allocation2 + $0xd0] sm:$0xff]
    %v308 = vld [vmem:[#allocation2 + $0xd8] sm:$0xff]
    %v309 = vld [vmem:[#allocation2 + $0xe0] sm:$0xff]
    %v310 = vld [vmem:[#allocation2 + $0xe8] sm:$0xff]
    %v311 = vld [vmem:[#allocation2 + $0xf0] sm:$0xff]
    %v312 = vld [vmem:[#allocation2 + $0xf8] sm:$0xff]
    %v313 = vld [vmem:[#allocation2 + $0x100] sm:$0xff]
    %v314 = vld [vmem:[#allocation2 + $0x108] sm:$0x1]
    %v315 = vld [vmem:[#allocation2 + $0x109] sm:$0x1]
    %v316 = vld [vmem:[#allocation2 + $0x10a] sm:$0x1]
    %v317 = vsel %vm97, %v300, 0.0
    %318 = vadd.xlane.f32.xlu0 %v317
    %v319 = vpop.xlane.xlu0 %318
    %v320 = vsel %vm97, %v301, 0.0
    %321 = vadd.xlane.f32.xlu0 %v320
    %v322 = vpop.xlane.xlu0 %321
    %v323 = vmul.f32 %v319, %v110
    %v324 = vmul.f32 %v322, %v110
    %v325 = vsub.f32 %v300, %v323
    %v326 = vsub.f32 %v301, %v324
    %v327 = vmul.f32 %v325, %v325
    %v328 = vmul.f32 %v326, %v326
    %v329 = vsel %vm97, %v327, 0.0
    %330 = vadd.xlane.f32.xlu0 %v329
    %v331 = vpop.xlane.xlu0 %330
    %v332 = vsel %vm97, %v328, 0.0
    %333 = vadd.xlane.f32.xlu0 %v332
    %v334 = vpop.xlane.xlu0 %333
    %v335 = vmul.f32 %v331, %v110
    %v336 = vmul.f32 %v334, %v110
    %v337 = vadd.f32 %v335, 1e-05
    %v338 = vadd.f32 %v336, 1e-05
    %v339 = vrsqrt.pop %v337
    %v340 = vmul.f32 %v339, %v337
    %v341 = vmul.f32 %v340, %v339
    %v342 = vmul.f32 0.5, %v341
    %v343 = vsub.f32 1.5, %v342
    %v344 = vmul.f32 %v339, %v343
    %vm345 = vweird.f32 %v337
    %vm346 = vweird.f32 %v339
    %vm347 = vmor %vm345, %vm346
    %v348 = vsel %vm347, %v339, %v344
    %v349 = vrsqrt.pop %v338
    %v350 = vmul.f32 %v349, %v338
    %v351 = vmul.f32 %v350, %v349
    %v352 = vmul.f32 0.5, %v351
    %v353 = vsub.f32 1.5, %v352
    %v354 = vmul.f32 %v349, %v353
    %vm355 = vweird.f32 %v338
    %vm356 = vweird.f32 %v349
    %vm357 = vmor %vm355, %vm356
    %v358 = vsel %vm357, %v349, %v354
    %v359 = vmul.f32 %v325, %v348
    %v360 = vmul.f32 %v326, %v358
    %v361 = vperm.slane %v316, 0
    %v362 = vmul.f32 %v359, %v361
    %v363 = vmul.f32 %v360, %v361
    %v365 = vsel %vm152, %v302, 0
    %v368 = vsel %vm152, %v303, 0
    %370 = vmatpush.msra.mxu0 0.0
    %371 = vmatpush.msra.mxu0 0.0
    %372 = vmatpush.msra.mxu0 0.0
    %373 = vmatpush.msra.mxu0 0.0
    %374 = vmatpush.msra.mxu0 0.0
    %375 = vmatpush.msra.mxu0 0.0
    %376 = vmatpush.msra.mxu0 0.0
    %377 = vmatpush.msra.mxu0 0.0
    %378 = vmatpush.msra.mxu0 0.0
    %379 = vmatpush.msra.mxu0 0.0
    %380 = vmatpush.msra.mxu0 0.0
    %381 = vmatpush.msra.mxu0 0.0
    %382 = vmatpush.msra.mxu0 0.0
    %383 = vmatpush.msra.mxu0 0.0
    %384 = vmatpush.msra.mxu0 %v363
    %385 = vmatpush.msra.mxu0 %v362
    %386 = vmatmul.f32.gmra.mxu0 %v365
    %v387 = vpop.f32.mrf.mxu0
    %v388 = vadd.f32 %v312, %v387
    %389 = vmatmul.f32.gmra.mxu0 %v368
    %v390 = vpop.f32.mrf.mxu0
    %v391 = vadd.f32 %v313, %v390
    %392 = vdwg.mxu0
    %v393 = vadd.f32 %v300, %v388
    %v394 = vadd.f32 %v301, %v391
    %v395 = vsel %vm97, %v393, 0.0
    %396 = vadd.xlane.f32.xlu0 %v395
    %v397 = vpop.xlane.xlu0 %396
    %v398 = vsel %vm97, %v394, 0.0
    %399 = vadd.xlane.f32.xlu0 %v398
    %v400 = vpop.xlane.xlu0 %399
    %v401 = vmul.f32 %v397, %v110
    %v402 = vmul.f32 %v400, %v110
    %v403 = vsub.f32 %v393, %v401
    %v404 = vsub.f32 %v394, %v402
    %v405 = vmul.f32 %v403, %v403
    %v406 = vmul.f32 %v404, %v404
    %v407 = vsel %vm97, %v405, 0.0
    %408 = vadd.xlane.f32.xlu0 %v407
    %v409 = vpop.xlane.xlu0 %408
    %v410 = vsel %vm97, %v406, 0.0
    %411 = vadd.xlane.f32.xlu0 %v410
    %v412 = vpop.xlane.xlu0 %411
    %v413 = vmul.f32 %v409, %v110
    %v414 = vmul.f32 %v412, %v110
    %v415 = vadd.f32 %v413, 1e-05
    %v416 = vadd.f32 %v414, 1e-05
    %v417 = vrsqrt.pop %v415
    %v418 = vmul.f32 %v417, %v415
    %v419 = vmul.f32 %v418, %v417
    %v420 = vmul.f32 0.5, %v419
    %v421 = vsub.f32 1.5, %v420
    %v422 = vmul.f32 %v417, %v421
    %vm423 = vweird.f32 %v415
    %vm424 = vweird.f32 %v417
    %vm425 = vmor %vm423, %vm424
    %v426 = vsel %vm425, %v417, %v422
    %v427 = vrsqrt.pop %v416
    %v428 = vmul.f32 %v427, %v416
    %v429 = vmul.f32 %v428, %v427
    %v430 = vmul.f32 0.5, %v429
    %v431 = vsub.f32 1.5, %v430
    %v432 = vmul.f32 %v427, %v431
    %vm433 = vweird.f32 %v416
    %vm434 = vweird.f32 %v427
    %vm435 = vmor %vm433, %vm434
    %v436 = vsel %vm435, %v427, %v432
    %v437 = vmul.f32 %v403, %v426
    %v438 = vmul.f32 %v404, %v436
    %v439 = vperm.slane %v314, 0
    %v441 = vsel %vm97, %v437, 0
    %v444 = vsel %vm97, %v438, 0
    %446 = vmatpush.msra.mxu0 0.0
    %447 = vmatpush.msra.mxu0 0.0
    %448 = vmatpush.msra.mxu0 0.0
    %449 = vmatpush.msra.mxu0 0.0
    %450 = vmatpush.msra.mxu0 0.0
    %451 = vmatpush.msra.mxu0 0.0
    %452 = vmatpush.msra.mxu0 0.0
    %453 = vmatpush.msra.mxu0 0.0
    %454 = vmatpush.msra.mxu0 0.0
    %455 = vmatpush.msra.mxu0 0.0
    %456 = vmatpush.msra.mxu0 0.0
    %457 = vmatpush.msra.mxu0 0.0
    %458 = vmatpush.msra.mxu0 %v307
    %459 = vmatpush.msra.mxu0 %v306
    %460 = vmatpush.msra.mxu0 %v305
    %461 = vmatpush.msra.mxu0 %v304
    %462 = vmatmul.f32.gmra.mxu0 %v441
    %v463 = vpop.f32.mrf.mxu0
    %v464 = vadd.f32 %v439, %v463
    %465 = vmatmul.f32.gmra.mxu0 %v444
    %v466 = vpop.f32.mrf.mxu0
    %v467 = vadd.f32 %v439, %v466
    %468 = vdwg.mxu0
    %v469 = vmul.f32 %v464, %v464
    %v470 = vmul.f32 %v467, %v467
    %v471 = vmul.f32 %v464, %v469
    %v472 = vmul.f32 %v467, %v470
    %v473 = vmul.f32 %v471, 0.044715
    %v474 = vmul.f32 %v472, 0.044715
    %v475 = vadd.f32 %v464, %v473
    %v476 = vadd.f32 %v467, %v474
    %v477 = vmul.f32 %v475, 0.7978846
    %v478 = vmul.f32 %v476, 0.7978846
    %v479 = vtanh.pop %v477
    %v480 = vtanh.pop %v478
    %v481 = vadd.f32 %v479, 1.0
    %v482 = vadd.f32 %v480, 1.0
    %v483 = vmul.f32 %v481, 0.5
    %v484 = vmul.f32 %v482, 0.5
    %v485 = vmul.f32 %v464, %v483
    %v486 = vmul.f32 %v467, %v484
    %v487 = vperm.slane %v315, 0
    %488 = vmatpush.xpose.msra.mxu0 0.0
    %489 = vmatpush.xpose.msra.mxu0 0.0
    %490 = vmatpush.xpose.msra.mxu0 0.0
    %491 = vmatpush.xpose.msra.mxu0 0.0
    %492 = vmatpush.xpose.msra.mxu0 0.0
    %493 = vmatpush.xpose.msra.mxu0 0.0
    %494 = vmatpush.xpose.msra.mxu0 0.0
    %495 = vmatpush.xpose.msra.mxu0 0.0
    %496 = vmatpush.xpose.msra.mxu0 0.0
    %497 = vmatpush.xpose.msra.mxu0 0.0
    %498 = vmatpush.xpose.msra.mxu0 0.0
    %499 = vmatpush.xpose.msra.mxu0 0.0
    %500 = vmatpush.xpose.msra.mxu0 %v311
    %501 = vmatpush.xpose.msra.mxu0 %v310
    %502 = vmatpush.xpose.msra.mxu0 %v309
    %503 = vmatpush.xpose.msra.mxu0 %v308
    %504 = vmatmul.f32.gmra.mxu0 %v485
    %v505 = vpop.f32.mrf.mxu0
    %v506 = vadd.f32 %v487, %v505
    %507 = vmatmul.f32.gmra.mxu0 %v486
    %v508 = vpop.f32.mrf.mxu0
    %v509 = vadd.f32 %v487, %v508
    %510 = vdwg.mxu0
    %v511 = vadd.f32 %v393, %v506
    %v512 = vadd.f32 %v394, %v509
    %513 = vst.msk [vmem:[#allocation5] sm:$0xff] %vm97, %v511
    %514 = vst.msk [vmem:[#allocation5 + $0x8] sm:$0xff] %vm97, %v512
    // Predicated region
    $region14: #{truncated_model_forward.1} parent=1 // pred_check
      _
    $region15: #{truncated_model_forward.1} parent=1 // pred_check_branch
      %516 = sbr.rel (0) target = $region17
    $region16: #{truncated_model_forward.1} parent=1 // pred_region
      %518 = vsyncadd [#allocation4], 0
      %s519 = sshll.u32 [#allocation5], 4
      %s520 = int_to_ptr.vmem [resolvable:$true] %s519
      %s521 = sshll.u32 %s2, 4
      %s522 = int_to_ptr.hbm [resolvable:$true] %s521
      %527 = dma.vmem_to_hbm [thread:$0]  %s520, 256, %s522, [#allocation4], 128, 128, 8
    $region17: #{truncated_model_forward.1} parent=1 // pred_fallthru
      _
    // Predicated region
    $region18: #{truncated_model_forward.1} parent=1 // pred_check
      _
    $region19: #{truncated_model_forward.1} parent=1 // pred_check_branch
      %529 = sbr.rel (0) target = $region21
    $region20: #{truncated_model_forward.1} parent=1 // pred_region
      %531 = dma.done [#allocation4], 256
    $region21: #{truncated_model_forward.1} parent=1 // pred_fallthru
      _
    %532 = vsyncpa [#allocation3], 1
    %533 = vsyncpa [#allocation4], 1

</llo_original>
